<compile_context>
chip_gen: v6e
topology: v6e:2x2x1
jax: 0.10.0
libtpu: 0.0.40
codegen_flags: <defaults>
</compile_context>

<pallas_src>
import jax
import jax.numpy as jnp
from jax.experimental import pallas as pl
from jax.experimental.pallas import tpu as pltpu


def _columnwise_dropout_kernel(x_ref, m_ref, o_ref):
    # x_ref / o_ref: (S_TILE, R_TILE, CC);  m_ref: (S_TILE, 1, CC)
    # Single broadcasted multiply along the folded L_res (second-to-last) axis.
    o_ref[...] = x_ref[...] * m_ref[...]


def _sublane(dtype) -> int:
    """Sublane count of the dtype's native (sublane, 128) tile."""
    return {1: 32, 2: 16, 4: 8}.get(jnp.dtype(dtype).itemsize, 8)


def _pick_fold(r: int, c: int, sublane: int) -> int:
    """Pick m dividing r with (m*c) % 128 == 0 (lane-dense stores).

    Among valid m, prefer ones where r//m is a multiple of the sublane count
    (full sublane tiles), then the highest sublane fill, then the smallest m
    (smallest mask / largest folded-R dim).  Returns 1 if no fold works.
    """
    best_key, best_m = None, 1
    for m in range(1, r + 1):
        if r % m or (m * c) % 128:
            continue
        rf = r // m
        fill = rf / (-(-rf // sublane) * sublane)
        key = (rf % sublane == 0, fill, -m)
        if best_key is None or key > best_key:
            best_key, best_m = key, m
    return best_m


_TARGET_BLOCK = 2 << 20   # ~2 MiB x-block: x+out double-buffered ~8 MiB < v5e's 16 MiB default
_MIN_BLOCK = 1 << 20      # don't shrink blocks below ~1 MiB just to add grid steps


def _pick_tiles(bs: int, rf: int, cc: int, itemsize: int, sublane: int):
    """Choose (s_tile, r_tile) for blocks of shape (s_tile, r_tile, cc)."""
    rf_pad = -(-rf // sublane) * sublane
    cc_pad = -(-cc // 128) * 128
    slab = rf_pad * cc_pad * itemsize          # padded VMEM bytes of one (1, rf, cc) row

    if slab > _TARGET_BLOCK:
        # One (b, s) row is already too big: split along the folded-R axis instead.
        r_tile = (_TARGET_BLOCK // (cc_pad * itemsize)) // sublane * sublane
        r_tile = min(max(r_tile, sublane), rf)
        return 1, r_tile

    budget_rows = max(1, _TARGET_BLOCK // slab)
    min_rows = max(1, _MIN_BLOCK // slab)
    # Cap the tile so large inputs get >= ~8 grid steps (v7x megacore + pipelining),
    # but never drop below ~1 MiB blocks; tiny inputs keep a single block.
    s_tile = min(bs, budget_rows, max(bs // 8, min_rows))

    steps = -(-bs // s_tile)
    if steps > 1 and steps % 2 == 1:
        # Nudge to an even step count so v7x's 2 TCs stay balanced.
        s_tile = max(1, -(-bs // (steps + 1)))
    return s_tile, rf


def columnwise_dropout(x: jax.Array, p: float, key: jax.Array, training: bool = True) -> jax.Array:
    """Pallas TPU implementation of ColumnwiseDropout.forward.

    x: (B, S, R, C).  The dropout mask is drawn per (B, S, C) and broadcast along R.
    NOTE: p must be a static Python float (it drives Python-level branches).
    """
    p = float(p)
    if (not training) or p == 0.0:
        return x
    if p >= 1.0:
        return jnp.zeros_like(x)

    B, S, R, C = x.shape
    sublane = _sublane(x.dtype)
    itemsize = jnp.dtype(x.dtype).itemsize

    # Small per-(b, s, c) mask in {0, 1/(1-p)} (x dtype), drawn outside the kernel.
    keep = jax.random.bernoulli(key, p=1.0 - p, shape=(B, S, 1, C))
    scale = jnp.asarray(1.0 / (1.0 - p), dtype=x.dtype)
    mask = jnp.where(keep, scale, jnp.zeros((), dtype=x.dtype))  # (B, S, 1, C)

    # Fold m L_res rows into the lane dim so the last dim is a multiple of 128.
    m = _pick_fold(R, C, sublane)
    # TODO(synk): when no fold gives a multiple of 128 (m == 1, e.g. C=24) stores fall
    # back to masked vst.msk; a ragged lane-fold (m = 128/gcd(C,128)) needs a copy.

    BS, Rf, CC = B * S, R // m, C * m
    xr = x.reshape(BS, Rf, CC)          # free row-major reshape (no data movement)
    mr = mask.reshape(BS, 1, C)
    if m > 1:
        # Same per-channel mask repeated for each of the m folded L_res rows.
        mr = jnp.tile(mr, (1, 1, m))    # (BS, 1, CC) -- tiny, done once outside the kernel

    s_tile, r_tile = _pick_tiles(BS, Rf, CC, itemsize, sublane)
    grid = (pl.cdiv(BS, s_tile), pl.cdiv(Rf, r_tile))   # ragged last blocks are fine

    out = pl.pallas_call(
        _columnwise_dropout_kernel,
        out_shape=jax.ShapeDtypeStruct((BS, Rf, CC), x.dtype),
        grid=grid,
        in_specs=[
            pl.BlockSpec((s_tile, r_tile, CC), lambda i, j: (i, j, 0)),
            pl.BlockSpec((s_tile, 1, CC), lambda i, j: (i, 0, 0)),
        ],
        out_specs=pl.BlockSpec((s_tile, r_tile, CC), lambda i, j: (i, j, 0)),
        compiler_params=pltpu.CompilerParams(
            dimension_semantics=("parallel", "parallel"),
        ),
    )(xr, mr)

    return out.reshape(B, S, R, C)


if __name__ == "__main__":
    root = jax.random.PRNGKey(0)
    kx, kd, kx2, kd2 = jax.random.split(root, 4)

    # MSA-style activation: (B, N_seq, L_res, C)
    B, S, R, C = 2, 8, 16, 32
    p = 0.3

    # Keep x away from 0 so the mask-recovery check (out / x) is numerically robust.
    x = jax.random.uniform(kx, (B, S, R, C), dtype=jnp.float32, minval=0.5, maxval=1.5)

    out = jax.block_until_ready(columnwise_dropout(x, p=p, key=kd, training=True))
    assert out.shape == x.shape and out.dtype == x.dtype

    ratio = out / x                                   # per-element mask value
    ref_row = ratio[:, :, :1, :]                      # (B, S, 1, C)
    same_along_R = jnp.allclose(ratio, jnp.broadcast_to(ref_row, ratio.shape), atol=1e-5)
    valid_values = jnp.all(
        jnp.isclose(ref_row, 0.0, atol=1e-6)
        | jnp.isclose(ref_row, 1.0 / (1.0 - p), atol=1e-5)
    )
    assert bool(same_along_R), "mask not broadcast correctly along L_res"
    assert bool(valid_values), "mask values are not in {0, 1/(1-p)}"

    # Fallback path where no fold makes the last dim a multiple of 128 (C=24).
    x2 = jax.random.uniform(kx2, (1, 2, 8, 24), dtype=jnp.float32, minval=0.5, maxval=1.5)
    out2 = jax.block_until_ready(columnwise_dropout(x2, p=0.25, key=kd2, training=True))
    r2 = out2 / x2
    assert bool(jnp.allclose(r2, jnp.broadcast_to(r2[:, :, :1, :], r2.shape), atol=1e-5))

    # bf16 path exercises the dtype-aware sublane/VMEM logic.
    x3 = jax.random.uniform(kx, (2, 4, 16, 64), dtype=jnp.float32, minval=0.5, maxval=1.5)
    x3 = x3.astype(jnp.bfloat16)
    out3 = jax.block_until_ready(columnwise_dropout(x3, p=0.1, key=kd2, training=True))
    assert out3.shape == x3.shape and out3.dtype == x3.dtype

    # Eval / p == 0 paths are identity.
    assert bool(jnp.array_equal(columnwise_dropout(x, p=p, key=kd, training=False), x))
    assert bool(jnp.array_equal(columnwise_dropout(x, p=0.0, key=kd, training=True), x))

    print("KERNEL_OK")
</pallas_src>

<mosaic_0001>
module attributes {stable_mosaic.version = 11 : i64} {
  func.func @_columnwise_dropout_kernel(%arg0: i32, %arg1: i32, %arg2: memref<16x4x128xf32, #tpu.memory_space<vmem>>, %arg3: memref<16x1x128xf32, #tpu.memory_space<vmem>>, %arg4: memref<16x4x128xf32, #tpu.memory_space<vmem>>) attributes {dimension_semantics = [#tpu.dimension_semantics<parallel>, #tpu.dimension_semantics<parallel>], iteration_bounds = array<i64: 1, 1>, scalar_prefetch = 0 : i64, scratch_operands = 0 : i64, tpu.core_type = #tpu.core_type<tc>, window_params = [{transform_indices = @transform_0, window_bounds = array<i64: 16, 4, 128>}, {transform_indices = @transform_1, window_bounds = array<i64: 16, 1, 128>}, {transform_indices = @transform_2, window_bounds = array<i64: 16, 4, 128>}]} {
    %c0 = arith.constant 0 : index
    %c0_0 = arith.constant 0 : index
    %c0_1 = arith.constant 0 : index
    %0 = vector.load %arg2[%c0, %c0_0, %c0_1] : memref<16x4x128xf32, #tpu.memory_space<vmem>>, vector<16x4x128xf32>
    %c0_2 = arith.constant 0 : index
    %c0_3 = arith.constant 0 : index
    %c0_4 = arith.constant 0 : index
    %1 = vector.load %arg3[%c0_2, %c0_3, %c0_4] : memref<16x1x128xf32, #tpu.memory_space<vmem>>, vector<16x1x128xf32>
    %2 = vector.broadcast %1 : vector<16x1x128xf32> to vector<16x4x128xf32>
    %3 = arith.mulf %0, %2 : vector<16x4x128xf32>
    %c0_5 = arith.constant 0 : index
    %c0_6 = arith.constant 0 : index
    %c0_7 = arith.constant 0 : index
    %4 = vector.load %arg4[%c0_5, %c0_6, %c0_7] : memref<16x4x128xf32, #tpu.memory_space<vmem>>, vector<16x4x128xf32>
    tpu.vector_store %arg4[%c0_5, %c0_6, %c0_7], %3 {strides = array<i32>} : memref<16x4x128xf32, #tpu.memory_space<vmem>>, vector<16x4x128xf32>,
    return
  }
  func.func @transform_0(%arg0: i32, %arg1: i32) -> (i32, i32, i32) {
    %c0_i32 = arith.constant 0 : i32
    %c0_i32_0 = arith.constant 0 : i32
    return %arg0, %arg1, %c0_i32 : i32, i32, i32
  }
  func.func @transform_1(%arg0: i32, %arg1: i32) -> (i32, i32, i32) {
    %c0_i32 = arith.constant 0 : i32
    %c0_i32_0 = arith.constant 0 : i32
    %c0_i32_1 = arith.constant 0 : i32
    return %arg0, %c0_i32, %c0_i32_0 : i32, i32, i32
  }
  func.func @transform_2(%arg0: i32, %arg1: i32) -> (i32, i32, i32) {
    %c0_i32 = arith.constant 0 : i32
    %c0_i32_0 = arith.constant 0 : i32
    return %arg0, %arg1, %c0_i32 : i32, i32, i32
  }
}

</mosaic_0001>

<llo_original>
// kernel: tpu_custom_call.1
$region0: #{tpu_custom_call.1}
  #allocation0 [shape = 'u32[]', space=smem, size = 0x4, offset = 0x4, fixed_abs, tag = 'smem constant byte address 0x4 - core index']
  #allocation1 [shape = 'u32[144,128]{1,0:T(1,128)}', space=vmem, size = 0x12000, scoped, tag = 'internal scratch']
  %s0 = inlined_call_operand.hbm [shape: f32[16,4,128], index: 0, kind: input, shape index: {}]
  %s1 = inlined_call_operand.hbm [shape: f32[16,1,128], index: 1, kind: input, shape index: {}]
  %s2 = inlined_call_operand.hbm [shape: f32[16,4,128], index: 2, kind: output, shape index: {}]
  %s3 = sld [smem:[#allocation0]]
  $region26: #{tpu_custom_call.1} parent=0
    _
  %s5 = ssub.s32 1, %s3
  %s6 = scalar_select 0, %s5, %s3
  $region1: #{tpu_custom_call.1} parent=0
    #allocation2 [shape = 'u8[32768]{0}', space=vmem, size = 0x8000, scoped, tag = 'input window, operand 0, single buffered']
    #allocation3 [shape = 's32[1]{0}', space=sflag, size = 0x4, scoped, tag = 'scoped memory for tpu_custom_call.1']
    #allocation4 [shape = 's32[1]{0}', space=sflag, size = 0x4, scoped, tag = 'scoped memory for tpu_custom_call.1']
    #allocation5 [shape = 'u8[8192]{0}', space=vmem, size = 0x2000, scoped, tag = 'input window, operand 1, single buffered']
    #allocation6 [shape = 's32[1]{0}', space=sflag, size = 0x4, scoped, tag = 'scoped memory for tpu_custom_call.1']
    #allocation7 [shape = 'u8[32768]{0}', space=vmem, size = 0x8000, scoped, tag = 'output window, operand 0, single buffered']
    %7 = vsyncpa [#allocation3], 0
    %8 = vsyncpa [#allocation6], 0
    %9 = vsyncpa [#allocation4], 0
    // Predicated region
    $region2: #{tpu_custom_call.1} parent=1 // pred_check
      _
    $region3: #{tpu_custom_call.1} parent=1 // pred_check_branch
      %11 = sbr.rel (0) target = $region5
    $region4: #{tpu_custom_call.1} parent=1 // pred_region
      %s13 = ssub.s32 1024, 1024
      %14 = vsyncadd [#allocation3], %s13
      %s15 = sshll.u32 [#allocation2], 4
      %s16 = int_to_ptr.vmem [resolvable:$true] %s15
      %21 = dma.hbm_to_vmem [thread:$0]  %s0, 1024, %s16, [#allocation3], 64, 64, 4
    $region5: #{tpu_custom_call.1} parent=1 // pred_fallthru
      _
    // Predicated region
    $region6: #{tpu_custom_call.1} parent=1 // pred_check
      _
    $region7: #{tpu_custom_call.1} parent=1 // pred_check_branch
      %23 = sbr.rel (0) target = $region9
    $region8: #{tpu_custom_call.1} parent=1 // pred_region
      %s25 = ssub.s32 256, 256
      %26 = vsyncadd [#allocation6], %s25
      %s27 = sshll.u32 [#allocation5], 4
      %s28 = int_to_ptr.vmem [resolvable:$true] %s27
      %33 = dma.hbm_to_vmem [thread:$0]  %s1, 256, %s28, [#allocation6], 16, 16, 1
    $region9: #{tpu_custom_call.1} parent=1 // pred_fallthru
      _
    // Predicated region
    $region10: #{tpu_custom_call.1} parent=1 // pred_check
      _
    $region11: #{tpu_custom_call.1} parent=1 // pred_check_branch
      %35 = sbr.rel (0) target = $region13
    $region12: #{tpu_custom_call.1} parent=1 // pred_region
      %36 = dma.done [#allocation3], 1024
    $region13: #{tpu_custom_call.1} parent=1 // pred_fallthru
      _
    // Predicated region
    $region14: #{tpu_custom_call.1} parent=1 // pred_check
      _
    $region15: #{tpu_custom_call.1} parent=1 // pred_check_branch
      %38 = sbr.rel (0) target = $region17
    $region16: #{tpu_custom_call.1} parent=1 // pred_region
      %39 = dma.done [#allocation6], 256
    $region17: #{tpu_custom_call.1} parent=1 // pred_fallthru
      _
    %v40 = vld [vmem:[#allocation2] sm:$0xf]
    %v41 = vld [vmem:[#allocation2 + $0x4] sm:$0xf]
    %v42 = vld [vmem:[#allocation2 + $0x8] sm:$0xf]
    %v43 = vld [vmem:[#allocation2 + $0xc] sm:$0xf]
    %v44 = vld [vmem:[#allocation2 + $0x10] sm:$0xf]
    %v45 = vld [vmem:[#allocation2 + $0x14] sm:$0xf]
    %v46 = vld [vmem:[#allocation2 + $0x18] sm:$0xf]
    %v47 = vld [vmem:[#allocation2 + $0x1c] sm:$0xf]
    %v48 = vld [vmem:[#allocation2 + $0x20] sm:$0xf]
    %v49 = vld [vmem:[#allocation2 + $0x24] sm:$0xf]
    %v50 = vld [vmem:[#allocation2 + $0x28] sm:$0xf]
    %v51 = vld [vmem:[#allocation2 + $0x2c] sm:$0xf]
    %v52 = vld [vmem:[#allocation2 + $0x30] sm:$0xf]
    %v53 = vld [vmem:[#allocation2 + $0x34] sm:$0xf]
    %v54 = vld [vmem:[#allocation2 + $0x38] sm:$0xf]
    %v55 = vld [vmem:[#allocation2 + $0x3c] sm:$0xf]
    %v56 = vld [vmem:[#allocation5] sm:$0x1]
    %v57 = vld [vmem:[#allocation5 + $0x1] sm:$0x1]
    %v58 = vld [vmem:[#allocation5 + $0x2] sm:$0x1]
    %v59 = vld [vmem:[#allocation5 + $0x3] sm:$0x1]
    %v60 = vld [vmem:[#allocation5 + $0x4] sm:$0x1]
    %v61 = vld [vmem:[#allocation5 + $0x5] sm:$0x1]
    %v62 = vld [vmem:[#allocation5 + $0x6] sm:$0x1]
    %v63 = vld [vmem:[#allocation5 + $0x7] sm:$0x1]
    %v64 = vld [vmem:[#allocation5 + $0x8] sm:$0x1]
    %v65 = vld [vmem:[#allocation5 + $0x9] sm:$0x1]
    %v66 = vld [vmem:[#allocation5 + $0xa] sm:$0x1]
    %v67 = vld [vmem:[#allocation5 + $0xb] sm:$0x1]
    %v68 = vld [vmem:[#allocation5 + $0xc] sm:$0x1]
    %v69 = vld [vmem:[#allocation5 + $0xd] sm:$0x1]
    %v70 = vld [vmem:[#allocation5 + $0xe] sm:$0x1]
    %v71 = vld [vmem:[#allocation5 + $0xf] sm:$0x1]
    %v88 = vlaneseq
    %v89 = vshrl.u32 %v88, 7
    %v90 = vsub.s32 0, %v89
    %v91 = vrot.slane %v56, %v90
    %v92 = vlaneseq
    %v93 = vshrl.u32 %v92, 7
    %v94 = vsub.s32 0, %v93
    %v95 = vrot.slane %v57, %v94
    %v96 = vlaneseq
    %v97 = vshrl.u32 %v96, 7
    %v98 = vsub.s32 0, %v97
    %v99 = vrot.slane %v58, %v98
    %v100 = vlaneseq
    %v101 = vshrl.u32 %v100, 7
    %v102 = vsub.s32 0, %v101
    %v103 = vrot.slane %v59, %v102
    %v104 = vlaneseq
    %v105 = vshrl.u32 %v104, 7
    %v106 = vsub.s32 0, %v105
    %v107 = vrot.slane %v60, %v106
    %v108 = vlaneseq
    %v109 = vshrl.u32 %v108, 7
    %v110 = vsub.s32 0, %v109
    %v111 = vrot.slane %v61, %v110
    %v112 = vlaneseq
    %v113 = vshrl.u32 %v112, 7
    %v114 = vsub.s32 0, %v113
    %v115 = vrot.slane %v62, %v114
    %v116 = vlaneseq
    %v117 = vshrl.u32 %v116, 7
    %v118 = vsub.s32 0, %v117
    %v119 = vrot.slane %v63, %v118
    %v120 = vlaneseq
    %v121 = vshrl.u32 %v120, 7
    %v122 = vsub.s32 0, %v121
    %v123 = vrot.slane %v64, %v122
    %v124 = vlaneseq
    %v125 = vshrl.u32 %v124, 7
    %v126 = vsub.s32 0, %v125
    %v127 = vrot.slane %v65, %v126
    %v128 = vlaneseq
    %v129 = vshrl.u32 %v128, 7
    %v130 = vsub.s32 0, %v129
    %v131 = vrot.slane %v66, %v130
    %v132 = vlaneseq
    %v133 = vshrl.u32 %v132, 7
    %v134 = vsub.s32 0, %v133
    %v135 = vrot.slane %v67, %v134
    %v136 = vlaneseq
    %v137 = vshrl.u32 %v136, 7
    %v138 = vsub.s32 0, %v137
    %v139 = vrot.slane %v68, %v138
    %v140 = vlaneseq
    %v141 = vshrl.u32 %v140, 7
    %v142 = vsub.s32 0, %v141
    %v143 = vrot.slane %v69, %v142
    %v144 = vlaneseq
    %v145 = vshrl.u32 %v144, 7
    %v146 = vsub.s32 0, %v145
    %v147 = vrot.slane %v70, %v146
    %v148 = vlaneseq
    %v149 = vshrl.u32 %v148, 7
    %v150 = vsub.s32 0, %v149
    %v151 = vrot.slane %v71, %v150
    %v168 = vmul.f32 %v40, %v91
    %v169 = vmul.f32 %v41, %v95
    %v170 = vmul.f32 %v42, %v99
    %v171 = vmul.f32 %v43, %v103
    %v172 = vmul.f32 %v44, %v107
    %v173 = vmul.f32 %v45, %v111
    %v174 = vmul.f32 %v46, %v115
    %v175 = vmul.f32 %v47, %v119
    %v176 = vmul.f32 %v48, %v123
    %v177 = vmul.f32 %v49, %v127
    %v178 = vmul.f32 %v50, %v131
    %v179 = vmul.f32 %v51, %v135
    %v180 = vmul.f32 %v52, %v139
    %v181 = vmul.f32 %v53, %v143
    %v182 = vmul.f32 %v54, %v147
    %v183 = vmul.f32 %v55, %v151
    %184 = vst [vmem:[#allocation7] sm:$0xf] %v168
    %185 = vst [vmem:[#allocation7 + $0x4] sm:$0xf] %v169
    %186 = vst [vmem:[#allocation7 + $0x8] sm:$0xf] %v170
    %187 = vst [vmem:[#allocation7 + $0xc] sm:$0xf] %v171
    %188 = vst [vmem:[#allocation7 + $0x10] sm:$0xf] %v172
    %189 = vst [vmem:[#allocation7 + $0x14] sm:$0xf] %v173
    %190 = vst [vmem:[#allocation7 + $0x18] sm:$0xf] %v174
    %191 = vst [vmem:[#allocation7 + $0x1c] sm:$0xf] %v175
    %192 = vst [vmem:[#allocation7 + $0x20] sm:$0xf] %v176
    %193 = vst [vmem:[#allocation7 + $0x24] sm:$0xf] %v177
    %194 = vst [vmem:[#allocation7 + $0x28] sm:$0xf] %v178
    %195 = vst [vmem:[#allocation7 + $0x2c] sm:$0xf] %v179
    %196 = vst [vmem:[#allocation7 + $0x30] sm:$0xf] %v180
    %197 = vst [vmem:[#allocation7 + $0x34] sm:$0xf] %v181
    %198 = vst [vmem:[#allocation7 + $0x38] sm:$0xf] %v182
    %199 = vst [vmem:[#allocation7 + $0x3c] sm:$0xf] %v183
    // Predicated region
    $region18: #{tpu_custom_call.1} parent=1 // pred_check
      _
    $region19: #{tpu_custom_call.1} parent=1 // pred_check_branch
      %201 = sbr.rel (0) target = $region21
    $region20: #{tpu_custom_call.1} parent=1 // pred_region
      %s203 = ssub.s32 1024, 1024
      %204 = vsyncadd [#allocation4], %s203
      %s205 = sshll.u32 [#allocation7], 4
      %s206 = int_to_ptr.vmem [resolvable:$true] %s205
      %211 = dma.vmem_to_hbm [thread:$0]  %s206, 1024, %s2, [#allocation4], 64, 64, 4
    $region21: #{tpu_custom_call.1} parent=1 // pred_fallthru
      _
    // Predicated region
    $region22: #{tpu_custom_call.1} parent=1 // pred_check
      _
    $region23: #{tpu_custom_call.1} parent=1 // pred_check_branch
      %213 = sbr.rel (0) target = $region25
    $region24: #{tpu_custom_call.1} parent=1 // pred_region
      %214 = dma.done [#allocation4], 1024
    $region25: #{tpu_custom_call.1} parent=1 // pred_fallthru
      _
    %215 = vsyncpa [#allocation3], 1
    %216 = vsyncpa [#allocation6], 1
    %217 = vsyncpa [#allocation4], 1

</llo_original>
